<compile_context>
chip_gen: v7x
topology: tpu7x:2x2x1
jax: 0.10.0
libtpu: 0.0.40
codegen_flags: <defaults>
</compile_context>

<pallas_src>
import functools

import jax
import jax.numpy as jnp
from jax.experimental import pallas as pl
from jax.experimental.pallas import tpu as pltpu

NUM_CONCEPTS = 21          # concepts_labeled has 21 entries (pred_5 = Linear(21, 1))
EPS = 1e-5
INV_Z = 1.0 / (1.0 + 2.0 * EPS)       # per-concept normalizer (z == 1 + 2*eps)
OUT_SCALE = 1.0 / (1.0 + 2.0 * EPS)   # final (pred + eps) / (1 + 2*eps)
OUT_SHIFT = EPS / (1.0 + 2.0 * EPS)


def _round_up(n, m):
    return ((n + m - 1) // m) * m


# ----------------------------------------------------------------------------
# Pallas kernel
# ----------------------------------------------------------------------------
def dpl_kernel(x_ref, wc_ref, bc_ref, w5_ref, b5_ref, out_ref):
    # --- synthetic conceptizer: linear (bf16 MXU, f32 accum) + sigmoid
    logits = jnp.dot(x_ref[...], wc_ref[...],
                     preferred_element_type=jnp.float32) + bc_ref[...]
    concepts = jax.nn.sigmoid(logits)                         # (BB, 21) f32, in (0,1)

    # --- expand_normalize_concepts, negative halves only (positives not needed):
    #     negn_i = (1 - c_i + eps) / (1 + 2*eps)
    negn = (1.0 - concepts + EPS) * INV_Z                     # (BB, 21)

    def prod_cols(start, n):
        p = negn[:, start:start + 1]
        for j in range(1, n):
            p = p * negn[:, start + j:start + j + 1]
        return p                                              # (BB, 1)

    # group "all concepts false" probabilities
    # concept groups: forward 0..2, stop 3..8, left 9..11, no_left 12..14,
    #                 right 15..17, no_right 18..20
    F0 = prod_cols(0, 3)
    S0 = prod_cols(3, 6)
    L0 = prod_cols(9, 3)
    NL0 = prod_cols(12, 3)
    R0 = prod_cols(15, 3)
    NR0 = prod_cols(18, 3)

    # closed-form rules (worlds sum to 1 after normalization):
    #   forward = P(F OR)=1 & P(S OR)=0 ; stop = 1 - forward
    lab_fwd = (1.0 - F0) * S0
    lab_stop = 1.0 - lab_fwd
    #   left  = P(L OR)=1 & P(NL OR)=0 ; right analogous
    lab_left = (1.0 - L0) * NL0
    lab_right = (1.0 - R0) * NR0

    # pred_5: Linear(21, 1) on the raw concepts, then sigmoid
    lab4 = jax.nn.sigmoid(
        jnp.dot(concepts, w5_ref[...], preferred_element_type=jnp.float32)
        + b5_ref[...])                                        # (BB, 1)

    pred = jnp.concatenate(
        [lab_fwd, lab_stop,
         lab_left, 1.0 - lab_left,
         lab_right, 1.0 - lab_right,
         lab4, 1.0 - lab4], axis=1)                           # (BB, 8)

    # fused (pred + eps) / (1 + 2*eps)
    out_ref[...] = pred * OUT_SCALE + OUT_SHIFT


# ----------------------------------------------------------------------------
# wrapper (glue: NCHW flatten, bf16 cast, batch grid, pallas_call)
# ----------------------------------------------------------------------------
@functools.partial(jax.jit, static_argnames=("block_b",))
def dpl_forward(x_nchw, Wc, bc, w5, b5, *, block_b=4096):
    B = x_nchw.shape[0]
    x2d = x_nchw.reshape(B, -1).astype(jnp.bfloat16)          # (B, D), bf16 HBM stream
    D = x2d.shape[1]

    bb = min(block_b, _round_up(B, 8))                        # batch tile (multiple of 8)
    Bp = _round_up(B, bb)
    if Bp != B:
        x2d = jnp.pad(x2d, ((0, Bp - B), (0, 0)))

    out = pl.pallas_call(
        dpl_kernel,
        out_shape=jax.ShapeDtypeStruct((Bp, 8), jnp.float32),
        grid=(Bp // bb,),
        in_specs=[
            pl.BlockSpec((bb, D), lambda i: (i, 0)),                   # x: streamed
            pl.BlockSpec((D, NUM_CONCEPTS), lambda i: (0, 0)),         # Wc: resident
            pl.BlockSpec((1, NUM_CONCEPTS), lambda i: (0, 0)),         # bc
            pl.BlockSpec((NUM_CONCEPTS, 1), lambda i: (0, 0)),         # w5
            pl.BlockSpec((1, 1), lambda i: (0, 0)),                    # b5
        ],
        out_specs=pl.BlockSpec((bb, 8), lambda i: (i, 0)),
        compiler_params=pltpu.CompilerParams(
            dimension_semantics=("parallel",)),
    )(x2d, Wc.astype(jnp.bfloat16), bc.astype(jnp.float32),
      w5.astype(jnp.float32), b5.astype(jnp.float32))
    return out[:B]


# ----------------------------------------------------------------------------
# logic tables (create_w_to_y) -- used only by the reference implementation
# ----------------------------------------------------------------------------
def make_logic_tables():
    or3 = jnp.concatenate([jnp.zeros((8, 1)), jnp.ones((8, 1))], axis=1)
    or3 = or3.at[0].set(jnp.array([1.0, 0.0])).astype(jnp.float32)
    or6 = jnp.concatenate([jnp.zeros((64, 1)), jnp.ones((64, 1))], axis=1)
    or6 = or6.at[0].set(jnp.array([1.0, 0.0])).astype(jnp.float32)
    rule_fs = jnp.array([[0, 1], [0, 1], [1, 0], [0, 1]], dtype=jnp.float32)
    rule_lr = jnp.array([[0], [0], [1], [0]], dtype=jnp.float32)
    return or3, or6, rule_fs, rule_lr


# ----------------------------------------------------------------------------
# pure-JAX reference mirroring the PyTorch code (full table-based formulation,
# validates the closed-form rewrite).  Inputs to the conceptizer matmul are
# rounded to bf16 exactly as in the kernel so the comparison is apples-to-apples.
# ----------------------------------------------------------------------------
def dpl_reference(x_nchw, Wc, bc, w5, b5):
    or3, or6, rule_fs, rule_lr = make_logic_tables()
    B = x_nchw.shape[0]
    x = x_nchw.reshape(B, -1).astype(jnp.bfloat16).astype(jnp.float32)
    Wc_q = Wc.astype(jnp.bfloat16).astype(jnp.float32)
    concepts = jax.nn.sigmoid(x @ Wc_q + bc)                  # (B, 21)

    pC_cols = []
    for i in range(NUM_CONCEPTS):
        c = jnp.concatenate([1.0 - concepts[:, i:i + 1],
                             concepts[:, i:i + 1]], axis=1) + EPS
        Z = jnp.sum(c, axis=1, keepdims=True)
        pC_cols.append(c / Z)
    pC = jnp.concatenate(pC_cols, axis=1)                     # (B, 42)

    def or_three(sl):
        A = pC[:, sl:sl + 2][:, :, None, None]
        Bm = pC[:, sl + 2:sl + 4][:, None, :, None]
        C = pC[:, sl + 4:sl + 6][:, None, None, :]
        worlds = (A * Bm * C).reshape(B, 8)
        return jnp.einsum('bi,ik->bk', worlds, or3)

    def or_six(sl):
        parts = []
        for j in range(6):
            shape = [B] + [1] * 6
            shape[1 + j] = 2
            parts.append(pC[:, sl + 2 * j: sl + 2 * j + 2].reshape(shape))
        worlds = parts[0]
        for p in parts[1:]:
            worlds = worlds * p
        worlds = worlds.reshape(B, 64)
        return jnp.einsum('bi,ik->bk', worlds, or6)

    F_pred = or_three(0)
    S_pred = or_six(6)
    L_pred = or_three(18)
    NL_pred = or_three(24)
    R_pred = or_three(30)
    NR_pred = or_three(36)

    w_FS = (F_pred[:, :, None] * S_pred[:, None, :]).reshape(B, 4)
    labels_01 = jnp.einsum('bi,ik->bk', w_FS, rule_fs)
    w_L = (L_pred[:, :, None] * NL_pred[:, None, :]).reshape(B, 4)
    labels_2 = jnp.einsum('bi,il->bl', w_L, rule_lr)
    w_R = (R_pred[:, :, None] * NR_pred[:, None, :]).reshape(B, 4)
    labels_3 = jnp.einsum('bi,il->bl', w_R, rule_lr)
    labels_4 = jax.nn.sigmoid(concepts @ w5 + b5)

    labels_2 = jnp.concatenate([labels_2, 1.0 - labels_2], axis=1)
    labels_3 = jnp.concatenate([labels_3, 1.0 - labels_3], axis=1)
    labels_4 = jnp.concatenate([labels_4, 1.0 - labels_4], axis=1)
    pred = jnp.concatenate([labels_01, labels_2, labels_3, labels_4], axis=1)
    return (pred + EPS) / (1.0 + 2.0 * EPS)


# ----------------------------------------------------------------------------
# main
# ----------------------------------------------------------------------------
if __name__ == "__main__":
    key = jax.random.PRNGKey(0)
    kx, kw, kb, kw5, kb5 = jax.random.split(key, 5)

    B, C, H, W = 8, 4, 8, 8
    D = C * H * W

    x_nchw = jax.random.normal(kx, (B, C, H, W), dtype=jnp.float32)

    # deterministic synthetic parameters (conceptizer linear + pred_5)
    Wc = 0.1 * jax.random.normal(kw, (D, NUM_CONCEPTS), dtype=jnp.float32)
    bc = 0.1 * jax.random.normal(kb, (1, NUM_CONCEPTS), dtype=jnp.float32)
    w5 = 0.1 * jax.random.normal(kw5, (NUM_CONCEPTS, 1), dtype=jnp.float32)
    b5 = 0.1 * jax.random.normal(kb5, (1, 1), dtype=jnp.float32)

    out = dpl_forward(x_nchw, Wc, bc, w5, b5)
    out = jax.block_until_ready(out)

    ref = dpl_reference(x_nchw, Wc, bc, w5, b5)

    assert out.shape == (B, 8), out.shape
    assert bool(jnp.all(jnp.isfinite(out)))
    assert bool(jnp.allclose(out, ref, rtol=2e-3, atol=2e-3)), (out, ref)

    print("KERNEL_OK")
</pallas_src>

<mosaic_0001>
module attributes {stable_mosaic.version = 11 : i64} {
  func.func @dpl_kernel(%arg0: i32, %arg1: memref<8x256xbf16, #tpu.memory_space<vmem>>, %arg2: memref<256x21xbf16, #tpu.memory_space<vmem>>, %arg3: memref<1x21xf32, #tpu.memory_space<vmem>>, %arg4: memref<21x1xf32, #tpu.memory_space<vmem>>, %arg5: memref<1x1xf32, #tpu.memory_space<vmem>>, %arg6: memref<8x8xf32, #tpu.memory_space<vmem>>) attributes {dimension_semantics = [#tpu.dimension_semantics<parallel>], iteration_bounds = array<i64: 1>, scalar_prefetch = 0 : i64, scratch_operands = 0 : i64, tpu.core_type = #tpu.core_type<tc>, window_params = [{transform_indices = @transform_0, window_bounds = array<i64: 8, 256>}, {pipeline_mode = #tpu.pipeline_mode<synchronous>, transform_indices = @transform_1, window_bounds = array<i64: 256, 21>}, {pipeline_mode = #tpu.pipeline_mode<synchronous>, transform_indices = @transform_2, window_bounds = array<i64: 1, 21>}, {pipeline_mode = #tpu.pipeline_mode<synchronous>, transform_indices = @transform_3, window_bounds = array<i64: 21, 1>}, {pipeline_mode = #tpu.pipeline_mode<synchronous>, transform_indices = @transform_4, window_bounds = array<i64: 1, 1>}, {transform_indices = @transform_5, window_bounds = array<i64: 8, 8>}]} {
    %c0 = arith.constant 0 : index
    %c0_0 = arith.constant 0 : index
    %0 = vector.load %arg1[%c0, %c0_0] : memref<8x256xbf16, #tpu.memory_space<vmem>>, vector<8x256xbf16>
    %c0_1 = arith.constant 0 : index
    %c0_2 = arith.constant 0 : index
    %1 = vector.load %arg2[%c0_1, %c0_2] : memref<256x21xbf16, #tpu.memory_space<vmem>>, vector<256x21xbf16>
    %cst = arith.constant dense<0.000000e+00> : vector<8x21xf32>
    %2 = tpu.matmul %0, %1, %cst {dimension_numbers = #tpu.dot_dimension_numbers<[1], [0], [0], [1], [0, 0, 1, 1], [], []>} : vector<8x256xbf16>, vector<256x21xbf16>, vector<8x21xf32> -> vector<8x21xf32>
    %c0_3 = arith.constant 0 : index
    %c0_4 = arith.constant 0 : index
    %3 = vector.load %arg3[%c0_3, %c0_4] : memref<1x21xf32, #tpu.memory_space<vmem>>, vector<1x21xf32>
    %4 = vector.broadcast %3 : vector<1x21xf32> to vector<8x21xf32>
    %5 = arith.addf %2, %4 : vector<8x21xf32>
    %6 = arith.negf %5 : vector<8x21xf32>
    %7 = math.exp %6 : vector<8x21xf32>
    %cst_5 = arith.constant 1.000000e+00 : f32
    %8 = vector.broadcast %cst_5 : f32 to vector<8x21xf32>
    %9 = arith.addf %8, %7 : vector<8x21xf32>
    %10 = arith.divf %8, %9 : vector<8x21xf32>
    %cst_6 = arith.constant 1.000000e+00 : f32
    %11 = vector.broadcast %cst_6 : f32 to vector<8x21xf32>
    %12 = arith.subf %11, %10 : vector<8x21xf32>
    %cst_7 = arith.constant 9.99999974E-6 : f32
    %13 = vector.broadcast %cst_7 : f32 to vector<8x21xf32>
    %14 = arith.addf %12, %13 : vector<8x21xf32>
    %cst_8 = arith.constant 0.999979972 : f32
    %15 = vector.broadcast %cst_8 : f32 to vector<8x21xf32>
    %16 = arith.mulf %14, %15 : vector<8x21xf32>
    %17 = vector.extract_strided_slice %16 {offsets = [0, 0], sizes = [8, 1], strides = [1, 1]} : vector<8x21xf32> to vector<8x1xf32>
    %18 = vector.extract_strided_slice %16 {offsets = [0, 1], sizes = [8, 1], strides = [1, 1]} : vector<8x21xf32> to vector<8x1xf32>
    %19 = arith.mulf %17, %18 : vector<8x1xf32>
    %20 = vector.extract_strided_slice %16 {offsets = [0, 2], sizes = [8, 1], strides = [1, 1]} : vector<8x21xf32> to vector<8x1xf32>
    %21 = arith.mulf %19, %20 : vector<8x1xf32>
    %22 = vector.extract_strided_slice %16 {offsets = [0, 3], sizes = [8, 1], strides = [1, 1]} : vector<8x21xf32> to vector<8x1xf32>
    %23 = vector.extract_strided_slice %16 {offsets = [0, 4], sizes = [8, 1], strides = [1, 1]} : vector<8x21xf32> to vector<8x1xf32>
    %24 = arith.mulf %22, %23 : vector<8x1xf32>
    %25 = vector.extract_strided_slice %16 {offsets = [0, 5], sizes = [8, 1], strides = [1, 1]} : vector<8x21xf32> to vector<8x1xf32>
    %26 = arith.mulf %24, %25 : vector<8x1xf32>
    %27 = vector.extract_strided_slice %16 {offsets = [0, 6], sizes = [8, 1], strides = [1, 1]} : vector<8x21xf32> to vector<8x1xf32>
    %28 = arith.mulf %26, %27 : vector<8x1xf32>
    %29 = vector.extract_strided_slice %16 {offsets = [0, 7], sizes = [8, 1], strides = [1, 1]} : vector<8x21xf32> to vector<8x1xf32>
    %30 = arith.mulf %28, %29 : vector<8x1xf32>
    %31 = vector.extract_strided_slice %16 {offsets = [0, 8], sizes = [8, 1], strides = [1, 1]} : vector<8x21xf32> to vector<8x1xf32>
    %32 = arith.mulf %30, %31 : vector<8x1xf32>
    %33 = vector.extract_strided_slice %16 {offsets = [0, 9], sizes = [8, 1], strides = [1, 1]} : vector<8x21xf32> to vector<8x1xf32>
    %34 = vector.extract_strided_slice %16 {offsets = [0, 10], sizes = [8, 1], strides = [1, 1]} : vector<8x21xf32> to vector<8x1xf32>
    %35 = arith.mulf %33, %34 : vector<8x1xf32>
    %36 = vector.extract_strided_slice %16 {offsets = [0, 11], sizes = [8, 1], strides = [1, 1]} : vector<8x21xf32> to vector<8x1xf32>
    %37 = arith.mulf %35, %36 : vector<8x1xf32>
    %38 = vector.extract_strided_slice %16 {offsets = [0, 12], sizes = [8, 1], strides = [1, 1]} : vector<8x21xf32> to vector<8x1xf32>
    %39 = vector.extract_strided_slice %16 {offsets = [0, 13], sizes = [8, 1], strides = [1, 1]} : vector<8x21xf32> to vector<8x1xf32>
    %40 = arith.mulf %38, %39 : vector<8x1xf32>
    %41 = vector.extract_strided_slice %16 {offsets = [0, 14], sizes = [8, 1], strides = [1, 1]} : vector<8x21xf32> to vector<8x1xf32>
    %42 = arith.mulf %40, %41 : vector<8x1xf32>
    %43 = vector.extract_strided_slice %16 {offsets = [0, 15], sizes = [8, 1], strides = [1, 1]} : vector<8x21xf32> to vector<8x1xf32>
    %44 = vector.extract_strided_slice %16 {offsets = [0, 16], sizes = [8, 1], strides = [1, 1]} : vector<8x21xf32> to vector<8x1xf32>
    %45 = arith.mulf %43, %44 : vector<8x1xf32>
    %46 = vector.extract_strided_slice %16 {offsets = [0, 17], sizes = [8, 1], strides = [1, 1]} : vector<8x21xf32> to vector<8x1xf32>
    %47 = arith.mulf %45, %46 : vector<8x1xf32>
    %48 = vector.extract_strided_slice %16 {offsets = [0, 18], sizes = [8, 1], strides = [1, 1]} : vector<8x21xf32> to vector<8x1xf32>
    %49 = vector.extract_strided_slice %16 {offsets = [0, 19], sizes = [8, 1], strides = [1, 1]} : vector<8x21xf32> to vector<8x1xf32>
    %50 = arith.mulf %48, %49 : vector<8x1xf32>
    %51 = vector.extract_strided_slice %16 {offsets = [0, 20], sizes = [8, 1], strides = [1, 1]} : vector<8x21xf32> to vector<8x1xf32>
    %52 = arith.mulf %50, %51 : vector<8x1xf32>
    %cst_9 = arith.constant 1.000000e+00 : f32
    %53 = vector.broadcast %cst_9 : f32 to vector<8x1xf32>
    %54 = arith.subf %53, %21 : vector<8x1xf32>
    %55 = arith.mulf %54, %32 : vector<8x1xf32>
    %cst_10 = arith.constant 1.000000e+00 : f32
    %56 = vector.broadcast %cst_10 : f32 to vector<8x1xf32>
    %57 = arith.subf %56, %55 : vector<8x1xf32>
    %cst_11 = arith.constant 1.000000e+00 : f32
    %58 = vector.broadcast %cst_11 : f32 to vector<8x1xf32>
    %59 = arith.subf %58, %37 : vector<8x1xf32>
    %60 = arith.mulf %59, %42 : vector<8x1xf32>
    %cst_12 = arith.constant 1.000000e+00 : f32
    %61 = vector.broadcast %cst_12 : f32 to vector<8x1xf32>
    %62 = arith.subf %61, %47 : vector<8x1xf32>
    %63 = arith.mulf %62, %52 : vector<8x1xf32>
    %c0_13 = arith.constant 0 : index
    %c0_14 = arith.constant 0 : index
    %64 = vector.load %arg4[%c0_13, %c0_14] : memref<21x1xf32, #tpu.memory_space<vmem>>, vector<21x1xf32>
    %cst_15 = arith.constant dense<0.000000e+00> : vector<8x1xf32>
    %65 = tpu.matmul %10, %64, %cst_15 {dimension_numbers = #tpu.dot_dimension_numbers<[1], [0], [0], [1], [0, 0, 1, 1], [], []>} : vector<8x21xf32>, vector<21x1xf32>, vector<8x1xf32> -> vector<8x1xf32>
    %c0_16 = arith.constant 0 : index
    %c0_17 = arith.constant 0 : index
    %66 = vector.load %arg5[%c0_16, %c0_17] : memref<1x1xf32, #tpu.memory_space<vmem>>, vector<1x1xf32>
    %67 = vector.broadcast %66 : vector<1x1xf32> to vector<8x1xf32>
    %68 = arith.addf %65, %67 : vector<8x1xf32>
    %69 = arith.negf %68 : vector<8x1xf32>
    %70 = math.exp %69 : vector<8x1xf32>
    %cst_18 = arith.constant 1.000000e+00 : f32
    %71 = vector.broadcast %cst_18 : f32 to vector<8x1xf32>
    %72 = arith.addf %71, %70 : vector<8x1xf32>
    %73 = arith.divf %71, %72 : vector<8x1xf32>
    %cst_19 = arith.constant 1.000000e+00 : f32
    %74 = vector.broadcast %cst_19 : f32 to vector<8x1xf32>
    %75 = arith.subf %74, %60 : vector<8x1xf32>
    %cst_20 = arith.constant 1.000000e+00 : f32
    %76 = vector.broadcast %cst_20 : f32 to vector<8x1xf32>
    %77 = arith.subf %76, %63 : vector<8x1xf32>
    %cst_21 = arith.constant 1.000000e+00 : f32
    %78 = vector.broadcast %cst_21 : f32 to vector<8x1xf32>
    %79 = arith.subf %78, %73 : vector<8x1xf32>
    %80 = tpu.concatenate %55, %57, %60, %75, %63, %77, %73, %79 in 1 : vector<8x1xf32>, vector<8x1xf32>, vector<8x1xf32>, vector<8x1xf32>, vector<8x1xf32>, vector<8x1xf32>, vector<8x1xf32>, vector<8x1xf32> -> vector<8x8xf32>
    %cst_22 = arith.constant 0.999979972 : f32
    %81 = vector.broadcast %cst_22 : f32 to vector<8x8xf32>
    %82 = arith.mulf %80, %81 : vector<8x8xf32>
    %cst_23 = arith.constant 9.999800e-06 : f32
    %83 = vector.broadcast %cst_23 : f32 to vector<8x8xf32>
    %84 = arith.addf %82, %83 : vector<8x8xf32>
    %c0_24 = arith.constant 0 : index
    %c0_25 = arith.constant 0 : index
    %85 = vector.load %arg6[%c0_24, %c0_25] : memref<8x8xf32, #tpu.memory_space<vmem>>, vector<8x8xf32>
    tpu.vector_store %arg6[%c0_24, %c0_25], %84 {strides = array<i32>} : memref<8x8xf32, #tpu.memory_space<vmem>>, vector<8x8xf32>,
    return
  }
  func.func @transform_0(%arg0: i32) -> (i32, i32) {
    %c0_i32 = arith.constant 0 : i32
    %c0_i32_0 = arith.constant 0 : i32
    return %arg0, %c0_i32 : i32, i32
  }
  func.func @transform_1(%arg0: i32) -> (i32, i32) {
    %c0_i32 = arith.constant 0 : i32
    %c0_i32_0 = arith.constant 0 : i32
    %c0_i32_1 = arith.constant 0 : i32
    return %c0_i32, %c0_i32_0 : i32, i32
  }
  func.func @transform_2(%arg0: i32) -> (i32, i32) {
    %c0_i32 = arith.constant 0 : i32
    %c0_i32_0 = arith.constant 0 : i32
    %c0_i32_1 = arith.constant 0 : i32
    return %c0_i32, %c0_i32_0 : i32, i32
  }
  func.func @transform_3(%arg0: i32) -> (i32, i32) {
    %c0_i32 = arith.constant 0 : i32
    %c0_i32_0 = arith.constant 0 : i32
    %c0_i32_1 = arith.constant 0 : i32
    return %c0_i32, %c0_i32_0 : i32, i32
  }
  func.func @transform_4(%arg0: i32) -> (i32, i32) {
    %c0_i32 = arith.constant 0 : i32
    %c0_i32_0 = arith.constant 0 : i32
    %c0_i32_1 = arith.constant 0 : i32
    return %c0_i32, %c0_i32_0 : i32, i32
  }
  func.func @transform_5(%arg0: i32) -> (i32, i32) {
    %c0_i32 = arith.constant 0 : i32
    %c0_i32_0 = arith.constant 0 : i32
    return %arg0, %c0_i32 : i32, i32
  }
}

</mosaic_0001>

<llo_original>
// kernel: dpl_forward.1
$region0: #{dpl_forward.1}
  #allocation0 [shape = 'u32[]', space=smem, size = 0x4, offset = 0x4, fixed_abs, tag = 'smem constant byte address 0x4 - core index']
  #allocation1 [shape = 'u32[144,128]{1,0:T(1,128)}', space=vmem, size = 0x12000, scoped, tag = 'internal scratch']
  #allocation2 [shape = 'f32[1,1]{1,0:T(1,128)S(1)}', space=vmem, size = 0x200, scoped, tag = 'scoped memory for dpl_forward.1']
  %s0 = inlined_call_operand.vmem [shape: bf16[8,256], index: 0, kind: input, shape index: {}]
  %s1 = inlined_call_operand.vmem [shape: bf16[256,21], index: 1, kind: input, shape index: {}]
  %s2 = inlined_call_operand.vmem [shape: f32[1,21], index: 2, kind: input, shape index: {}]
  %s3 = inlined_call_operand.vmem [shape: f32[21,1], index: 3, kind: input, shape index: {}]
  %s4 = inlined_call_operand.<no memory space> [shape: f32[1,1], index: 4, kind: input, shape index: {}]
  %s5 = inlined_call_operand.hbm [shape: f32[8,8], index: 5, kind: output, shape index: {}]
  %s6 = sld [smem:[#allocation0]]
  $region30: #{dpl_forward.1} parent=0
    _
  %s8 = ssub.s32 1, %s6
  %s9 = scalar_select 0, %s8, %s6
  %v10 = vstv %s4
  %11 = vst [vmem:[#allocation2] sm:$0x1] %v10
  $region1: #{dpl_forward.1} parent=0
    #allocation3 [shape = 'u8[4096]{0}', space=vmem, size = 0x1000, scoped, tag = 'output window, operand 0, single buffered']
    #allocation4 [shape = 's32[1]{0}', space=sflag, size = 0x4, scoped, tag = 'scoped memory for dpl_forward.1']
    %12 = vsyncpa [#allocation4], 0
    // Predicated region
    $region2: #{dpl_forward.1} parent=1 // pred_check
      _
    $region3: #{dpl_forward.1} parent=1 // pred_check_branch
      %14 = sbr.rel (0) target = $region5
    $region4: #{dpl_forward.1} parent=1 // pred_region
      _
    $region5: #{dpl_forward.1} parent=1 // pred_fallthru
      _
    // Predicated region
    $region6: #{dpl_forward.1} parent=1 // pred_check
      _
    $region7: #{dpl_forward.1} parent=1 // pred_check_branch
      %16 = sbr.rel (0) target = $region9
    $region8: #{dpl_forward.1} parent=1 // pred_region
      _
    $region9: #{dpl_forward.1} parent=1 // pred_fallthru
      _
    // Predicated region
    $region10: #{dpl_forward.1} parent=1 // pred_check
      _
    $region11: #{dpl_forward.1} parent=1 // pred_check_branch
      %18 = sbr.rel (0) target = $region13
    $region12: #{dpl_forward.1} parent=1 // pred_region
      _
    $region13: #{dpl_forward.1} parent=1 // pred_fallthru
      _
    // Predicated region
    $region14: #{dpl_forward.1} parent=1 // pred_check
      _
    $region15: #{dpl_forward.1} parent=1 // pred_check_branch
      %20 = sbr.rel (0) target = $region17
    $region16: #{dpl_forward.1} parent=1 // pred_region
      _
    $region17: #{dpl_forward.1} parent=1 // pred_fallthru
      _
    // Predicated region
    $region18: #{dpl_forward.1} parent=1 // pred_check
      _
    $region19: #{dpl_forward.1} parent=1 // pred_check_branch
      %22 = sbr.rel (0) target = $region21
    $region20: #{dpl_forward.1} parent=1 // pred_region
      _
    $region21: #{dpl_forward.1} parent=1 // pred_fallthru
      _
    %v24 = vld [vmem:[%s0] sm:$0xff]
    %v25 = vld [vmem:[%s1] sm:$0xf]
    %v26 = vld [vmem:[%s1 + $0x4] sm:$0xf]
    %v27 = vld [vmem:[%s1 + $0x8] sm:$0xf]
    %v28 = vld [vmem:[%s1 + $0xc] sm:$0xf]
    %v29 = vld [vmem:[%s1 + $0x10] sm:$0xf]
    %v30 = vld [vmem:[%s1 + $0x14] sm:$0xf]
    %v31 = vld [vmem:[%s1 + $0x18] sm:$0xf]
    %v32 = vld [vmem:[%s1 + $0x1c] sm:$0xf]
    %v33 = vld [vmem:[%s1 + $0x20] sm:$0xf]
    %v34 = vld [vmem:[%s1 + $0x24] sm:$0xf]
    %v35 = vld [vmem:[%s1 + $0x28] sm:$0xf]
    %v36 = vld [vmem:[%s1 + $0x2c] sm:$0xf]
    %v37 = vld [vmem:[%s1 + $0x30] sm:$0xf]
    %v38 = vld [vmem:[%s1 + $0x34] sm:$0xf]
    %v39 = vld [vmem:[%s1 + $0x38] sm:$0xf]
    %v40 = vld [vmem:[%s1 + $0x3c] sm:$0xf]
    %v41 = vld [vmem:[%s1 + $0x40] sm:$0xf]
    %v42 = vld [vmem:[%s1 + $0x44] sm:$0xf]
    %v43 = vld [vmem:[%s1 + $0x48] sm:$0xf]
    %v44 = vld [vmem:[%s1 + $0x4c] sm:$0xf]
    %v45 = vld [vmem:[%s1 + $0x50] sm:$0xf]
    %v46 = vld [vmem:[%s1 + $0x54] sm:$0xf]
    %v47 = vld [vmem:[%s1 + $0x58] sm:$0xf]
    %v48 = vld [vmem:[%s1 + $0x5c] sm:$0xf]
    %v49 = vld [vmem:[%s1 + $0x60] sm:$0xf]
    %v50 = vld [vmem:[%s1 + $0x64] sm:$0xf]
    %v51 = vld [vmem:[%s1 + $0x68] sm:$0xf]
    %v52 = vld [vmem:[%s1 + $0x6c] sm:$0xf]
    %v53 = vld [vmem:[%s1 + $0x70] sm:$0xf]
    %v54 = vld [vmem:[%s1 + $0x74] sm:$0xf]
    %v55 = vld [vmem:[%s1 + $0x78] sm:$0xf]
    %v56 = vld [vmem:[%s1 + $0x7c] sm:$0xf]
    %v57 = vld [vmem:[%s2] sm:$0x1]
    %v59 = vlaneseq
    %v60 = vshrl.u32 %v59, 7
    %v61 = vsub.s32 0, %v60
    %v62 = vrot.slane %v57, %v61
    %v65 = vunpack.c.l.b16 %v24
    %v66 = vunpack.c.h.b16 %v24
    %v67 = vpack.c.b16 %v65, %v65
    %v68 = vpack.c.b16 %v66, %v66
    %v103 = vunpack.c.l.b16 %v25
    %v104 = vunpack.c.l.b16 %v26
    %v105 = vunpack.c.l.b16 %v27
    %v106 = vunpack.c.l.b16 %v28
    %v107 = vunpack.c.l.b16 %v29
    %v108 = vunpack.c.l.b16 %v30
    %v109 = vunpack.c.l.b16 %v31
    %v110 = vunpack.c.l.b16 %v32
    %v111 = vunpack.c.l.b16 %v33
    %v112 = vunpack.c.l.b16 %v34
    %v113 = vunpack.c.l.b16 %v35
    %v114 = vunpack.c.l.b16 %v36
    %v115 = vunpack.c.l.b16 %v37
    %v116 = vunpack.c.l.b16 %v38
    %v117 = vunpack.c.l.b16 %v39
    %v118 = vunpack.c.l.b16 %v40
    %v119 = vunpack.c.l.b16 %v41
    %v120 = vunpack.c.l.b16 %v42
    %v121 = vunpack.c.l.b16 %v43
    %v122 = vunpack.c.l.b16 %v44
    %v123 = vunpack.c.l.b16 %v45
    %v124 = vunpack.c.l.b16 %v46
    %v125 = vunpack.c.l.b16 %v47
    %v126 = vunpack.c.l.b16 %v48
    %v127 = vunpack.c.l.b16 %v49
    %v128 = vunpack.c.l.b16 %v50
    %v129 = vunpack.c.l.b16 %v51
    %v130 = vunpack.c.l.b16 %v52
    %v131 = vunpack.c.l.b16 %v53
    %v132 = vunpack.c.l.b16 %v54
    %v133 = vunpack.c.l.b16 %v55
    %v134 = vunpack.c.l.b16 %v56
    %v135 = vpack.c.b16 %v104, %v103
    %v136 = vpack.c.b16 %v106, %v105
    %v137 = vpack.c.b16 %v108, %v107
    %v138 = vpack.c.b16 %v110, %v109
    %v139 = vpack.c.b16 %v112, %v111
    %v140 = vpack.c.b16 %v114, %v113
    %v141 = vpack.c.b16 %v116, %v115
    %v142 = vpack.c.b16 %v118, %v117
    %v143 = vpack.c.b16 %v120, %v119
    %v144 = vpack.c.b16 %v122, %v121
    %v145 = vpack.c.b16 %v124, %v123
    %v146 = vpack.c.b16 %v126, %v125
    %v147 = vpack.c.b16 %v128, %v127
    %v148 = vpack.c.b16 %v130, %v129
    %v149 = vpack.c.b16 %v132, %v131
    %v150 = vpack.c.b16 %v134, %v133
    %167 = vmatprep.subr.bf16.mxu0 0
    %168 = vmatpush1.bf16.msra.mxu0 %v135
    %169 = vmatprep.subr.bf16.mxu0 0
    %170 = vmatpush1.bf16.msra.mxu0 %v136
    %171 = vmatprep.subr.bf16.mxu0 0
    %172 = vmatpush1.bf16.msra.mxu0 %v137
    %173 = vmatprep.subr.bf16.mxu0 0
    %174 = vmatpush1.bf16.msra.mxu0 %v138
    %175 = vmatprep.subr.bf16.mxu0 0
    %176 = vmatpush1.bf16.msra.mxu0 %v139
    %177 = vmatprep.subr.bf16.mxu0 0
    %178 = vmatpush1.bf16.msra.mxu0 %v140
    %179 = vmatprep.subr.bf16.mxu0 0
    %180 = vmatpush1.bf16.msra.mxu0 %v141
    %181 = vmatprep.subr.bf16.mxu0 0
    %182 = vmatpush1.bf16.msra.mxu0 %v142
    %183 = vmatprep.subr.bf16.mxu0 0
    %184 = vmatpush1.bf16.msra.mxu0 %v143
    %185 = vmatprep.subr.bf16.mxu0 0
    %186 = vmatpush1.bf16.msra.mxu0 %v144
    %187 = vmatprep.subr.bf16.mxu0 0
    %188 = vmatpush1.bf16.msra.mxu0 %v145
    %189 = vmatprep.subr.bf16.mxu0 0
    %190 = vmatpush1.bf16.msra.mxu0 %v146
    %191 = vmatprep.subr.bf16.mxu0 0
    %192 = vmatpush1.bf16.msra.mxu0 %v147
    %193 = vmatprep.subr.bf16.mxu0 0
    %194 = vmatpush1.bf16.msra.mxu0 %v148
    %195 = vmatprep.subr.bf16.mxu0 0
    %196 = vmatpush1.bf16.msra.mxu0 %v149
    %197 = vmatprep.subr.bf16.mxu0 0
    %198 = vmatpush1.bf16.msra.mxu0 %v150
    %199 = vmatprep.mubr.bf16.mxu0 %v68
    %200 = vmatmul.mubr.bf16.gmra.mrb[0].mxu0 %v67
    %v201 = vpop.f32.mrb[0].mxu0
    %v202 = vadd.f32 %v62, %v201
    %v203 = vpop.f32.mrb[0].mxu0
    %v204 = vpop.f32.mrb[0].mxu0
    %v205 = vpop.f32.mrb[0].mxu0
    %206 = vdwg.mxu0
    %v207 = vxor.u32 %v202, 2147483648
    %v208 = vmul.f32 %v207, 1.442695
    %v209 = vpow.pop %v208
    %v210 = vadd.f32 %v209, 1.0
    %v211 = vrcp.pop %v210
    %v212 = vmul.f32 1.0, %v211
    %v213 = vsub.f32 1.0, %v212
    %v214 = vadd.f32 %v213, 1e-05
    %v215 = vmul.f32 %v214, 0.99998
    %217 = vrot.lane.b32.xlu0 %v215, 127
    %v218 = vpop.permute.xlu0 %217
    %v220 = vmul.f32 %v215, %v218
    %221 = vrot.lane.b32.xlu0 %v215, 126
    %v222 = vpop.permute.xlu0 %221
    %v224 = vmul.f32 %v220, %v222
    %225 = vrot.lane.b32.xlu0 %v215, 125
    %v226 = vpop.permute.xlu0 %225
    %v228 = vmul.f32 %v224, %v226
    %229 = vrot.lane.b32.xlu0 %v215, 124
    %v230 = vpop.permute.xlu0 %229
    %v232 = vmul.f32 %v228, %v230
    %233 = vrot.lane.b32.xlu0 %v215, 123
    %v234 = vpop.permute.xlu0 %233
    %v236 = vmul.f32 %v232, %v234
    %v237 = vsub.f32 1.0, %v224
    %239 = vrot.lane.b32.xlu0 %v236, 125
    %v240 = vpop.permute.xlu0 %239
    %v242 = vmul.f32 %v237, %v240
    %v243 = vsub.f32 1.0, %v242
    %245 = vrot.lane.b32.xlu0 %v224, 125
    %v246 = vpop.permute.xlu0 %245
    %v248 = vmul.f32 %v237, %v246
    %v249 = vld [vmem:[%s3] sm:$0xff]
    %v250 = vld [vmem:[%s3 + $0x8] sm:$0xff]
    %v251 = vld [vmem:[%s3 + $0x10] sm:$0x1f]
    %v252 = vld [vmem:[#allocation2] sm:$0x1]
    %v254 = vlaneseq
    %v255 = vshrl.u32 %v254, 7
    %v256 = vsub.s32 0, %v255
    %v257 = vrot.slane %v252, %v256
    %vm259 = vcmask 171008
    %v261 = vsel %vm259, %v212, 0
    %vm263 = vcmask 1044480
    %v265 = vsel %vm263, %v251, 0
    %267 = vmatprep.subr.mxu0 0.0
    %268 = vmatpush1.msra.mxu0 %v249
    %269 = vmatprep.subr.mxu0 0.0
    %270 = vmatpush1.msra.mxu0 %v250
    %271 = vmatprep.subr.mxu0 0.0
    %272 = vmatpush1.msra.mxu0 %v265
    %273 = vmatprep.subr.mxu0 0.0
    %274 = vmatpush1.msra.mxu0 0.0
    %275 = vmatprep.subr.mxu0 0.0
    %276 = vmatpush1.msra.mxu0 0.0
    %277 = vmatprep.subr.mxu0 0.0
    %278 = vmatpush1.msra.mxu0 0.0
    %279 = vmatprep.subr.mxu0 0.0
    %280 = vmatpush1.msra.mxu0 0.0
    %281 = vmatprep.subr.mxu0 0.0
    %282 = vmatpush1.msra.mxu0 0.0
    %283 = vmatprep.subr.mxu0 0.0
    %284 = vmatpush1.msra.mxu0 0.0
    %285 = vmatprep.subr.mxu0 0.0
    %286 = vmatpush1.msra.mxu0 0.0
    %287 = vmatprep.subr.mxu0 0.0
    %288 = vmatpush1.msra.mxu0 0.0
    %289 = vmatprep.subr.mxu0 0.0
    %290 = vmatpush1.msra.mxu0 0.0
    %291 = vmatprep.subr.mxu0 0.0
    %292 = vmatpush1.msra.mxu0 0.0
    %293 = vmatprep.subr.mxu0 0.0
    %294 = vmatpush1.msra.mxu0 0.0
    %295 = vmatprep.subr.mxu0 0.0
    %296 = vmatpush1.msra.mxu0 0.0
    %297 = vmatprep.subr.mxu0 0.0
    %298 = vmatpush1.msra.mxu0 0.0
    %299 = vmatprep.subr.mxu0 0.0
    %300 = vmatpush1.msra.mxu0 0.0
    %301 = vmatprep.subr.mxu0 0.0
    %302 = vmatpush1.msra.mxu0 0.0
    %303 = vmatprep.subr.mxu0 0.0
    %304 = vmatpush1.msra.mxu0 0.0
    %305 = vmatprep.subr.mxu0 0.0
    %306 = vmatpush1.msra.mxu0 0.0
    %307 = vmatprep.subr.mxu0 0.0
    %308 = vmatpush1.msra.mxu0 0.0
    %309 = vmatprep.subr.mxu0 0.0
    %310 = vmatpush1.msra.mxu0 0.0
    %311 = vmatprep.subr.mxu0 0.0
    %312 = vmatpush1.msra.mxu0 0.0
    %313 = vmatprep.subr.mxu0 0.0
    %314 = vmatpush1.msra.mxu0 0.0
    %315 = vmatprep.subr.mxu0 0.0
    %316 = vmatpush1.msra.mxu0 0.0
    %317 = vmatprep.subr.mxu0 0.0
    %318 = vmatpush1.msra.mxu0 0.0
    %319 = vmatprep.subr.mxu0 0.0
    %320 = vmatpush1.msra.mxu0 0.0
    %321 = vmatprep.subr.mxu0 0.0
    %322 = vmatpush1.msra.mxu0 0.0
    %323 = vmatprep.subr.mxu0 0.0
    %324 = vmatpush1.msra.mxu0 0.0
    %325 = vmatprep.subr.mxu0 0.0
    %326 = vmatpush1.msra.mxu0 0.0
    %327 = vmatprep.subr.mxu0 0.0
    %328 = vmatpush1.msra.mxu0 0.0
    %329 = vmatprep.subr.mxu0 0.0
    %330 = vmatpush1.msra.mxu0 0.0
    %331 = vmatprep.mubr.f32.mxu0 0.0
    %332 = vmatmul.mubr.f32.gmra.mrb[0].mxu0 %v261
    %v333 = vpop.f32.mrb[0].mxu0
    %v334 = vadd.f32 %v257, %v333
    %v335 = vpop.f32.mrb[0].mxu0
    %336 = vdwg.mxu0
    %v337 = vxor.u32 %v334, 2147483648
    %v338 = vmul.f32 %v337, 1.442695
    %v339 = vpow.pop %v338
    %v340 = vadd.f32 %v339, 1.0
    %v341 = vrcp.pop %v340
    %v342 = vmul.f32 1.0, %v341
    %v343 = vsub.f32 1.0, %v248
    %v344 = vsub.f32 1.0, %v342
    %346 = vrot.lane.b32.xlu0 %v243, 1
    %v347 = vpop.permute.xlu0 %346
    %350 = vrot.lane.b32.xlu0 %v248, 121
    %v351 = vpop.permute.xlu0 %350
    %354 = vrot.lane.b32.xlu0 %v343, 122
    %v355 = vpop.permute.xlu0 %354
    %357 = vrot.lane.b32.xlu0 %v248, 117
    %v358 = vpop.permute.xlu0 %357
    %360 = vrot.lane.b32.xlu0 %v343, 118
    %v361 = vpop.permute.xlu0 %360
    %364 = vrot.lane.b32.xlu0 %v342, 6
    %v365 = vpop.permute.xlu0 %364
    %368 = vrot.lane.b32.xlu0 %v344, 7
    %v369 = vpop.permute.xlu0 %368
    %vm371 = vcmask 7168
    %v372 = vsel %vm371, %v242, %v347
    %vm373 = vcmask 15360
    %v374 = vsel %vm373, %v372, %v351
    %vm375 = vcmask 23552
    %v376 = vsel %vm375, %v374, %v355
    %vm377 = vcmask 31744
    %v378 = vsel %vm377, %v376, %v358
    %vm379 = vcmask 39936
    %v380 = vsel %vm379, %v378, %v361
    %vm381 = vcmask 48128
    %v382 = vsel %vm381, %v380, %v365
    %vm383 = vcmask 56320
    %v384 = vsel %vm383, %v382, %v369
    %v385 = vmul.f32 %v384, 0.99998
    %v386 = vadd.f32 %v385, 9.9998e-06
    %vm387 = vcmask 64512
    %388 = vst.msk [vmem:[#allocation3] sm:$0xff] %vm387, %v386
    // Predicated region
    $region22: #{dpl_forward.1} parent=1 // pred_check
      _
    $region23: #{dpl_forward.1} parent=1 // pred_check_branch
      %390 = sbr.rel (0) target = $region25
    $region24: #{dpl_forward.1} parent=1 // pred_region
      %s392 = ssub.s32 128, 128
      %393 = vsyncadd [#allocation4], %s392
      %s395 = sshll.u32 [#allocation3], 4
      %s396 = int_to_ptr.vmem [resolvable:$true] %s395
      %398 = dma.vmem_to_hbm [thread:$0]  %s396, 128, %s5, [#allocation4]
    $region25: #{dpl_forward.1} parent=1 // pred_fallthru
      _
    // Predicated region
    $region26: #{dpl_forward.1} parent=1 // pred_check
      _
    $region27: #{dpl_forward.1} parent=1 // pred_check_branch
      %400 = sbr.rel (0) target = $region29
    $region28: #{dpl_forward.1} parent=1 // pred_region
      %401 = dma.done [#allocation4], 128
    $region29: #{dpl_forward.1} parent=1 // pred_fallthru
      _
    %402 = vsyncpa [#allocation4], 1

</llo_original>
